<compile_context>
chip_gen: v7x
topology: tpu7x:2x2x1
jax: 0.10.0
libtpu: 0.0.40
codegen_flags: <defaults>
</compile_context>

<pallas_src>
import jax
import jax.numpy as jnp
from jax.experimental import pallas as pl
from jax.experimental.pallas import tpu as pltpu


def _round_up(n, m):
    return ((n + m - 1) // m) * m


# ---------------------------------------------------------------------------
# Kernels
# ---------------------------------------------------------------------------

def mlp_kernel_vec_out(x_ref, w1_ref, b1_ref, w2_ref, b2_ref, o_ref):
    """Fused: layer1 on the MXU, layer2 (out_dim == 1) as VPU mul + XLU row-reduce."""
    # Layer 1: (TM, D) @ (D, Hp) -> (TM, Hp); weights already (in, out), no .T needed.
    h = jnp.dot(x_ref[...], w1_ref[...], preferred_element_type=jnp.float32)
    h = jnp.maximum(h + b1_ref[...], 0.0)          # bias + ReLU
    # Dropout(p=0.0) == identity in the reference module.
    # TODO(synk): p>0 dropout would need pltpu.prng_seed/prng_random_bits + a seed input.

    # Layer 2: single output column -> elementwise multiply (VALU) + lane reduce (XLU),
    # avoiding a second MXU pass that would produce only one useful lane.
    y = jnp.sum(h * w2_ref[...], axis=-1, keepdims=True) + b2_ref[0, 0]
    o_ref[...] = y.astype(o_ref.dtype)


def mlp_kernel_mxu_out(x_ref, w1_ref, b1_ref, w2_ref, b2_ref, o_ref):
    """General fallback for out_dim > 1: both layers on the MXU (weights pre-transposed)."""
    h = jnp.dot(x_ref[...], w1_ref[...], preferred_element_type=jnp.float32)
    h = jnp.maximum(h + b1_ref[...], 0.0)
    y = jnp.dot(h, w2_ref[...], preferred_element_type=jnp.float32) + b2_ref[...]
    o_ref[...] = y.astype(o_ref.dtype)


# ---------------------------------------------------------------------------
# One-time parameter preparation (hoisted out of the per-call forward)
# ---------------------------------------------------------------------------

def prepare_params(w1, b1, w2, b2, *, compute_dtype=jnp.float32):
    """Transpose to (in, out) + zero-pad hidden dim to a multiple of 128, ONCE.

    ReLU(0)=0 and the padded W2 entries are 0, so the padding is numerically inert.
    compute_dtype=bf16 halves W1 bytes (pair with bf16 x from the caller for v6e/v7x).
    """
    H, D = w1.shape
    O = w2.shape[0]
    Hp = _round_up(H, 128)

    w1t = jnp.zeros((D, Hp), jnp.float32).at[:, :H].set(w1.T.astype(jnp.float32))
    w1t = w1t.astype(compute_dtype)
    b1p = jnp.zeros((1, Hp), jnp.float32).at[:, :H].set(
        b1.astype(jnp.float32).reshape(1, H))

    if O == 1:
        # w2 as a single broadcast row (1, Hp); scalar bias stays (1, 1) (SMEM later).
        w2p = jnp.zeros((1, Hp), jnp.float32).at[:, :H].set(
            w2.astype(jnp.float32).reshape(1, H))
    else:
        w2p = jnp.zeros((Hp, O), jnp.float32).at[:H, :].set(w2.T.astype(jnp.float32))
    b2p = b2.astype(jnp.float32).reshape(1, O)
    return w1t, b1p, w2p, b2p


# ---------------------------------------------------------------------------
# Forward
# ---------------------------------------------------------------------------

def _select_tile(B, D, O, x_itemsize, out_itemsize, weight_bytes):
    """Batch tile: as big as a generation-safe VMEM budget allows, but with enough
    grid steps that the 'parallel' axis can shard across v7x's two TensorCores."""
    VMEM_BUDGET = 12 << 20          # fits v5e's 16 MiB default scoped VMEM with headroom
    per_row = 2 * (D * x_itemsize + O * out_itemsize)   # double-buffered x + out rows
    tm = (VMEM_BUDGET - weight_bytes) // max(per_row, 1)
    tm = max(8, min(int(tm), 8192))
    MIN_STEPS = 4                    # >=2 steps -> both v7x TCs; ~4 keeps pipeline fed
    tm = min(tm, max(8, _round_up(pl.cdiv(B, MIN_STEPS), 8)))
    tm = min(tm, _round_up(B, 8))
    tm = max(8, (tm // 8) * 8)
    return tm


def mlp_forward(x, prepared_params):
    """Fused 2-layer MLP forward. `prepared_params` comes from prepare_params()."""
    w1t, b1p, w2p, b2p = prepared_params
    B, D = x.shape
    Hp = w1t.shape[1]
    O = b2p.shape[1]
    out_dtype = x.dtype

    x_itemsize = jnp.dtype(x.dtype).itemsize
    out_itemsize = jnp.dtype(out_dtype).itemsize
    weight_bytes = (D * Hp * jnp.dtype(w1t.dtype).itemsize
                    + Hp * 4 + w2p.size * 4 + O * 4)

    tm = _select_tile(B, D, O, x_itemsize, out_itemsize, weight_bytes)
    grid = (pl.cdiv(B, tm),)         # ragged last block handled/masked by Pallas

    x_spec = pl.BlockSpec((tm, D), lambda i: (i, 0))
    w1_spec = pl.BlockSpec((D, Hp), lambda i: (0, 0))     # VMEM-resident across grid
    b1_spec = pl.BlockSpec((1, Hp), lambda i: (0, 0))
    out_spec = pl.BlockSpec((tm, O), lambda i: (i, 0))
    # NOTE(perf): O=1 output is a (tm,1) column -> masked vst; total output bytes are
    # tiny here, so the lane-dense slab rewrite is left out unless profiling shows
    # exposed stores. pipeline_mode=pl.Buffered(3) on x_spec is another sweep candidate.

    vmem_needed = (weight_bytes
                   + 2 * tm * D * x_itemsize
                   + 2 * tm * O * out_itemsize)
    vmem_limit = min(48 << 20, max(16 << 20, int(vmem_needed * 1.5) + (2 << 20)))

    cost = pl.CostEstimate(
        flops=2 * B * (D * Hp + Hp * O),
        transcendentals=0,
        bytes_accessed=(B * D * x_itemsize + D * Hp * jnp.dtype(w1t.dtype).itemsize
                        + Hp * 4 + w2p.size * 4 + O * 4 + B * O * out_itemsize),
    )
    cparams = pltpu.CompilerParams(dimension_semantics=("parallel",),
                                   vmem_limit_bytes=vmem_limit)

    if O == 1:
        out = pl.pallas_call(
            mlp_kernel_vec_out,
            out_shape=jax.ShapeDtypeStruct((B, 1), out_dtype),
            grid=grid,
            in_specs=[x_spec, w1_spec, b1_spec,
                      pl.BlockSpec((1, Hp), lambda i: (0, 0)),
                      pl.BlockSpec((1, 1), lambda i: (0, 0),
                                   memory_space=pltpu.MemorySpace.SMEM)],
            out_specs=out_spec,
            compiler_params=cparams,
            cost_estimate=cost,
        )(x, w1t, b1p, w2p, b2p)
    else:
        out = pl.pallas_call(
            mlp_kernel_mxu_out,
            out_shape=jax.ShapeDtypeStruct((B, O), out_dtype),
            grid=grid,
            in_specs=[x_spec, w1_spec, b1_spec,
                      pl.BlockSpec((Hp, O), lambda i: (0, 0)),
                      pl.BlockSpec((1, O), lambda i: (0, 0))],
            out_specs=out_spec,
            compiler_params=cparams,
            cost_estimate=cost,
        )(x, w1t, b1p, w2p, b2p)

    return out


# ---------------------------------------------------------------------------
# Reference + test harness
# ---------------------------------------------------------------------------

def init_params(key, input_shape, layers_units):
    """Deterministic init mimicking torch.nn.Linear (uniform +-1/sqrt(fan_in))."""
    params = []
    units = [input_shape] + list(layers_units)
    for fan_in, fan_out in zip(units[:-1], units[1:]):
        key, kw, kb = jax.random.split(key, 3)
        bound = 1.0 / jnp.sqrt(jnp.float32(fan_in))
        w = jax.random.uniform(kw, (fan_out, fan_in), jnp.float32, -bound, bound)
        b = jax.random.uniform(kb, (1, fan_out), jnp.float32, -bound, bound)
        params.append((w, b))
    return params


def _ref_forward(x, w1, b1, w2, b2):
    """Pure-JAX reference at full f32 precision (same semantics as the PyTorch module)."""
    dn = (((1,), (1,)), ((), ()))
    h = jnp.maximum(
        jax.lax.dot_general(x, w1, dn, precision=jax.lax.Precision.HIGHEST) + b1, 0.0)
    return jax.lax.dot_general(h, w2, dn, precision=jax.lax.Precision.HIGHEST) + b2


if __name__ == "__main__":
    # Module defaults: layers_units=[100, 1]; small shapes for the check.
    input_shape = 32
    layers_units = [100, 1]
    batch = 8

    key = jax.random.PRNGKey(0)
    key, kx = jax.random.split(key)
    x = jax.random.normal(kx, (batch, input_shape), jnp.float32)
    (w1, b1), (w2, b2) = init_params(key, input_shape, layers_units)

    prepared = prepare_params(w1, b1, w2, b2)          # one-time weight prep
    out = mlp_forward(x, prepared)
    jax.block_until_ready(out)
    ref = _ref_forward(x, w1, b1, w2, b2)
    assert out.shape == (batch, layers_units[-1])
    assert jnp.allclose(out, ref, atol=1e-5, rtol=1e-5)

    # Ragged batch (B % tm != 0) exercising the multi-step grid + masked last block.
    key, kx2 = jax.random.split(key)
    x_big = jax.random.normal(kx2, (52, input_shape), jnp.float32)
    out_big = mlp_forward(x_big, prepared)
    jax.block_until_ready(out_big)
    ref_big = _ref_forward(x_big, w1, b1, w2, b2)
    assert out_big.shape == (52, 1)
    assert jnp.allclose(out_big, ref_big, atol=1e-4, rtol=1e-4)

    # Also exercise the general (out_dim > 1) MXU fallback path.
    (w1b, b1b), (w2b, b2b) = init_params(jax.random.PRNGKey(1), input_shape, [100, 4])
    prepared_b = prepare_params(w1b, b1b, w2b, b2b)
    out2 = mlp_forward(x, prepared_b)
    jax.block_until_ready(out2)
    ref2 = _ref_forward(x, w1b, b1b, w2b, b2b)
    assert out2.shape == (batch, 4)
    assert jnp.allclose(out2, ref2, atol=1e-5, rtol=1e-5)

    print("KERNEL_OK")
</pallas_src>

<mosaic_0001>
module attributes {stable_mosaic.version = 11 : i64} {
  func.func @mlp_kernel_vec_out(%arg0: i32, %arg1: memref<8x32xf32, #tpu.memory_space<vmem>>, %arg2: memref<32x128xf32, #tpu.memory_space<vmem>>, %arg3: memref<1x128xf32, #tpu.memory_space<vmem>>, %arg4: memref<1x128xf32, #tpu.memory_space<vmem>>, %arg5: memref<1x1xf32, #tpu.memory_space<smem>>, %arg6: memref<8x1xf32, #tpu.memory_space<vmem>>) attributes {dimension_semantics = [#tpu.dimension_semantics<parallel>], iteration_bounds = array<i64: 1>, scalar_prefetch = 0 : i64, scratch_operands = 0 : i64, tpu.core_type = #tpu.core_type<tc>, window_params = [{transform_indices = @transform_0, window_bounds = array<i64: 8, 32>}, {pipeline_mode = #tpu.pipeline_mode<synchronous>, transform_indices = @transform_1, window_bounds = array<i64: 32, 128>}, {pipeline_mode = #tpu.pipeline_mode<synchronous>, transform_indices = @transform_2, window_bounds = array<i64: 1, 128>}, {pipeline_mode = #tpu.pipeline_mode<synchronous>, transform_indices = @transform_3, window_bounds = array<i64: 1, 128>}, {transform_indices = @transform_4, window_bounds = array<i64: 1, 1>}, {transform_indices = @transform_5, window_bounds = array<i64: 8, 1>}]} {
    %c0 = arith.constant 0 : index
    %c0_0 = arith.constant 0 : index
    %0 = vector.load %arg1[%c0, %c0_0] : memref<8x32xf32, #tpu.memory_space<vmem>>, vector<8x32xf32>
    %c0_1 = arith.constant 0 : index
    %c0_2 = arith.constant 0 : index
    %1 = vector.load %arg2[%c0_1, %c0_2] : memref<32x128xf32, #tpu.memory_space<vmem>>, vector<32x128xf32>
    %cst = arith.constant dense<0.000000e+00> : vector<8x128xf32>
    %2 = tpu.matmul %0, %1, %cst {dimension_numbers = #tpu.dot_dimension_numbers<[1], [0], [0], [1], [0, 0, 1, 1], [], []>} : vector<8x32xf32>, vector<32x128xf32>, vector<8x128xf32> -> vector<8x128xf32>
    %c0_3 = arith.constant 0 : index
    %c0_4 = arith.constant 0 : index
    %3 = vector.load %arg3[%c0_3, %c0_4] : memref<1x128xf32, #tpu.memory_space<vmem>>, vector<1x128xf32>
    %4 = vector.broadcast %3 : vector<1x128xf32> to vector<8x128xf32>
    %5 = arith.addf %2, %4 : vector<8x128xf32>
    %cst_5 = arith.constant 0.000000e+00 : f32
    %6 = vector.broadcast %cst_5 : f32 to vector<8x128xf32>
    %7 = arith.maximumf %5, %6 : vector<8x128xf32>
    %c0_6 = arith.constant 0 : index
    %c0_7 = arith.constant 0 : index
    %8 = vector.load %arg4[%c0_6, %c0_7] : memref<1x128xf32, #tpu.memory_space<vmem>>, vector<1x128xf32>
    %9 = vector.broadcast %8 : vector<1x128xf32> to vector<8x128xf32>
    %10 = arith.mulf %7, %9 : vector<8x128xf32>
    %cst_8 = arith.constant dense<0.000000e+00> : vector<8xf32>
    %11 = vector.multi_reduction <add>, %10, %cst_8 [1] : vector<8x128xf32> to vector<8xf32>
    %12 = vector.shape_cast %11 : vector<8xf32> to vector<8x1xf32>
    %c0_9 = arith.constant 0 : index
    %c0_10 = arith.constant 0 : index
    %13 = memref.load %arg5[%c0_9, %c0_10] : memref<1x1xf32, #tpu.memory_space<smem>>
    %14 = vector.broadcast %13 : f32 to vector<8x1xf32>
    %15 = arith.addf %12, %14 : vector<8x1xf32>
    %c0_11 = arith.constant 0 : index
    %c0_12 = arith.constant 0 : index
    %16 = vector.load %arg6[%c0_11, %c0_12] : memref<8x1xf32, #tpu.memory_space<vmem>>, vector<8x1xf32>
    tpu.vector_store %arg6[%c0_11, %c0_12], %15 {strides = array<i32>} : memref<8x1xf32, #tpu.memory_space<vmem>>, vector<8x1xf32>,
    return
  }
  func.func @transform_0(%arg0: i32) -> (i32, i32) {
    %c0_i32 = arith.constant 0 : i32
    %c0_i32_0 = arith.constant 0 : i32
    return %arg0, %c0_i32 : i32, i32
  }
  func.func @transform_1(%arg0: i32) -> (i32, i32) {
    %c0_i32 = arith.constant 0 : i32
    %c0_i32_0 = arith.constant 0 : i32
    %c0_i32_1 = arith.constant 0 : i32
    return %c0_i32, %c0_i32_0 : i32, i32
  }
  func.func @transform_2(%arg0: i32) -> (i32, i32) {
    %c0_i32 = arith.constant 0 : i32
    %c0_i32_0 = arith.constant 0 : i32
    %c0_i32_1 = arith.constant 0 : i32
    return %c0_i32, %c0_i32_0 : i32, i32
  }
  func.func @transform_3(%arg0: i32) -> (i32, i32) {
    %c0_i32 = arith.constant 0 : i32
    %c0_i32_0 = arith.constant 0 : i32
    %c0_i32_1 = arith.constant 0 : i32
    return %c0_i32, %c0_i32_0 : i32, i32
  }
  func.func @transform_4(%arg0: i32) -> (i32, i32) {
    %c0_i32 = arith.constant 0 : i32
    %c0_i32_0 = arith.constant 0 : i32
    %c0_i32_1 = arith.constant 0 : i32
    return %c0_i32, %c0_i32_0 : i32, i32
  }
  func.func @transform_5(%arg0: i32) -> (i32, i32) {
    %c0_i32 = arith.constant 0 : i32
    %c0_i32_0 = arith.constant 0 : i32
    return %arg0, %c0_i32 : i32, i32
  }
}

</mosaic_0001>

<llo_original>
// kernel: tpu_custom_call.1
$region0: #{tpu_custom_call.1}
  #allocation0 [shape = 'u32[]', space=smem, size = 0x4, offset = 0x4, fixed_abs, tag = 'smem constant byte address 0x4 - core index']
  #allocation1 [shape = 'u32[144,128]{1,0:T(1,128)}', space=vmem, size = 0x12000, scoped, tag = 'internal scratch']
  #allocation2 [shape = 'f32[1,1]{1,0:T(1,128)S(6)}', space=smem, size = 0x200, scoped, tag = 'scoped memory for tpu_custom_call.1']
  %s0 = inlined_call_operand.hbm [shape: f32[8,32], index: 0, kind: input, shape index: {}]
  %s1 = inlined_call_operand.hbm [shape: f32[32,128], index: 1, kind: input, shape index: {}]
  %s2 = inlined_call_operand.vmem [shape: f32[1,128], index: 2, kind: input, shape index: {}]
  %s3 = inlined_call_operand.vmem [shape: f32[1,128], index: 3, kind: input, shape index: {}]
  %s4 = inlined_call_operand.<no memory space> [shape: f32[1,1], index: 4, kind: input, shape index: {}]
  %s5 = inlined_call_operand.vmem [shape: f32[8,1], index: 5, kind: output, shape index: {}]
  %s6 = sld [smem:[#allocation0]]
  $region38: #{tpu_custom_call.1} parent=0
    _
  %s8 = ssub.s32 1, %s6
  %s9 = scalar_select 0, %s8, %s6
  %10 = sst [smem:[#allocation2]] %s4
  $region1: #{tpu_custom_call.1} parent=0
    #allocation3 [shape = 'u8[4096]{0}', space=vmem, size = 0x1000, scoped, tag = 'input window, operand 0, single buffered']
    #allocation4 [shape = 's32[1]{0}', space=sflag, size = 0x4, scoped, tag = 'scoped memory for tpu_custom_call.1']
    #allocation5 [shape = 'u8[16384]{0}', space=vmem, size = 0x4000, scoped, tag = 'input window, operand 1, single buffered']
    #allocation6 [shape = 's32[1]{0}', space=sflag, size = 0x4, scoped, tag = 'scoped memory for tpu_custom_call.1']
    %11 = vsyncpa [#allocation4], 0
    %12 = vsyncpa [#allocation6], 0
    // Predicated region
    $region2: #{tpu_custom_call.1} parent=1 // pred_check
      _
    $region3: #{tpu_custom_call.1} parent=1 // pred_check_branch
      %14 = sbr.rel (0) target = $region5
    $region4: #{tpu_custom_call.1} parent=1 // pred_region
      %s16 = ssub.s32 128, 128
      %17 = vsyncadd [#allocation4], %s16
      %s19 = sshll.u32 [#allocation3], 4
      %s20 = int_to_ptr.vmem [resolvable:$true] %s19
      %22 = dma.hbm_to_vmem [thread:$0]  %s0, 128, %s20, [#allocation4]
    $region5: #{tpu_custom_call.1} parent=1 // pred_fallthru
      _
    // Predicated region
    $region6: #{tpu_custom_call.1} parent=1 // pred_check
      _
    $region7: #{tpu_custom_call.1} parent=1 // pred_check_branch
      %24 = sbr.rel (0) target = $region9
    $region8: #{tpu_custom_call.1} parent=1 // pred_region
      %s26 = ssub.s32 512, 512
      %27 = vsyncadd [#allocation6], %s26
      %s28 = sshll.u32 [#allocation5], 4
      %s29 = int_to_ptr.vmem [resolvable:$true] %s28
      %34 = dma.hbm_to_vmem [thread:$0]  %s1, 512, %s29, [#allocation6], 128, 128, 8
    $region9: #{tpu_custom_call.1} parent=1 // pred_fallthru
      _
    // Predicated region
    $region10: #{tpu_custom_call.1} parent=1 // pred_check
      _
    $region11: #{tpu_custom_call.1} parent=1 // pred_check_branch
      %36 = sbr.rel (0) target = $region13
    $region12: #{tpu_custom_call.1} parent=1 // pred_region
      _
    $region13: #{tpu_custom_call.1} parent=1 // pred_fallthru
      _
    // Predicated region
    $region14: #{tpu_custom_call.1} parent=1 // pred_check
      _
    $region15: #{tpu_custom_call.1} parent=1 // pred_check_branch
      %38 = sbr.rel (0) target = $region17
    $region16: #{tpu_custom_call.1} parent=1 // pred_region
      _
    $region17: #{tpu_custom_call.1} parent=1 // pred_fallthru
      _
    // Predicated region
    $region18: #{tpu_custom_call.1} parent=1 // pred_check
      _
    $region19: #{tpu_custom_call.1} parent=1 // pred_check_branch
      %40 = sbr.rel (0) target = $region21
    $region20: #{tpu_custom_call.1} parent=1 // pred_region
      _
    $region21: #{tpu_custom_call.1} parent=1 // pred_fallthru
      _
    // Predicated region
    $region22: #{tpu_custom_call.1} parent=1 // pred_check
      _
    $region23: #{tpu_custom_call.1} parent=1 // pred_check_branch
      %42 = sbr.rel (0) target = $region25
    $region24: #{tpu_custom_call.1} parent=1 // pred_region
      %43 = dma.done [#allocation4], 128
    $region25: #{tpu_custom_call.1} parent=1 // pred_fallthru
      _
    // Predicated region
    $region26: #{tpu_custom_call.1} parent=1 // pred_check
      _
    $region27: #{tpu_custom_call.1} parent=1 // pred_check_branch
      %45 = sbr.rel (0) target = $region29
    $region28: #{tpu_custom_call.1} parent=1 // pred_region
      %46 = dma.done [#allocation6], 512
    $region29: #{tpu_custom_call.1} parent=1 // pred_fallthru
      _
    %v47 = vld [vmem:[#allocation3] sm:$0xff]
    %v48 = vld [vmem:[#allocation5] sm:$0xff]
    %v49 = vld [vmem:[#allocation5 + $0x8] sm:$0xff]
    %v50 = vld [vmem:[#allocation5 + $0x10] sm:$0xff]
    %v51 = vld [vmem:[#allocation5 + $0x18] sm:$0xff]
    %v52 = vld [vmem:[%s2] sm:$0x1]
    %v54 = vlaneseq
    %v55 = vshrl.u32 %v54, 7
    %v56 = vsub.s32 0, %v55
    %v57 = vrot.slane %v52, %v56
    %vm59 = vcmask 261120
    %v61 = vsel %vm59, %v47, 0
    %63 = vmatprep.subr.mxu0 0.0
    %64 = vmatpush1.msra.mxu0 %v48
    %65 = vmatprep.subr.mxu0 0.0
    %66 = vmatpush1.msra.mxu0 %v49
    %67 = vmatprep.subr.mxu0 0.0
    %68 = vmatpush1.msra.mxu0 %v50
    %69 = vmatprep.subr.mxu0 0.0
    %70 = vmatpush1.msra.mxu0 %v51
    %71 = vmatprep.subr.mxu0 0.0
    %72 = vmatpush1.msra.mxu0 0.0
    %73 = vmatprep.subr.mxu0 0.0
    %74 = vmatpush1.msra.mxu0 0.0
    %75 = vmatprep.subr.mxu0 0.0
    %76 = vmatpush1.msra.mxu0 0.0
    %77 = vmatprep.subr.mxu0 0.0
    %78 = vmatpush1.msra.mxu0 0.0
    %79 = vmatprep.subr.mxu0 0.0
    %80 = vmatpush1.msra.mxu0 0.0
    %81 = vmatprep.subr.mxu0 0.0
    %82 = vmatpush1.msra.mxu0 0.0
    %83 = vmatprep.subr.mxu0 0.0
    %84 = vmatpush1.msra.mxu0 0.0
    %85 = vmatprep.subr.mxu0 0.0
    %86 = vmatpush1.msra.mxu0 0.0
    %87 = vmatprep.subr.mxu0 0.0
    %88 = vmatpush1.msra.mxu0 0.0
    %89 = vmatprep.subr.mxu0 0.0
    %90 = vmatpush1.msra.mxu0 0.0
    %91 = vmatprep.subr.mxu0 0.0
    %92 = vmatpush1.msra.mxu0 0.0
    %93 = vmatprep.subr.mxu0 0.0
    %94 = vmatpush1.msra.mxu0 0.0
    %95 = vmatprep.subr.mxu0 0.0
    %96 = vmatpush1.msra.mxu0 0.0
    %97 = vmatprep.subr.mxu0 0.0
    %98 = vmatpush1.msra.mxu0 0.0
    %99 = vmatprep.subr.mxu0 0.0
    %100 = vmatpush1.msra.mxu0 0.0
    %101 = vmatprep.subr.mxu0 0.0
    %102 = vmatpush1.msra.mxu0 0.0
    %103 = vmatprep.subr.mxu0 0.0
    %104 = vmatpush1.msra.mxu0 0.0
    %105 = vmatprep.subr.mxu0 0.0
    %106 = vmatpush1.msra.mxu0 0.0
    %107 = vmatprep.subr.mxu0 0.0
    %108 = vmatpush1.msra.mxu0 0.0
    %109 = vmatprep.subr.mxu0 0.0
    %110 = vmatpush1.msra.mxu0 0.0
    %111 = vmatprep.subr.mxu0 0.0
    %112 = vmatpush1.msra.mxu0 0.0
    %113 = vmatprep.subr.mxu0 0.0
    %114 = vmatpush1.msra.mxu0 0.0
    %115 = vmatprep.subr.mxu0 0.0
    %116 = vmatpush1.msra.mxu0 0.0
    %117 = vmatprep.subr.mxu0 0.0
    %118 = vmatpush1.msra.mxu0 0.0
    %119 = vmatprep.subr.mxu0 0.0
    %120 = vmatpush1.msra.mxu0 0.0
    %121 = vmatprep.subr.mxu0 0.0
    %122 = vmatpush1.msra.mxu0 0.0
    %123 = vmatprep.subr.mxu0 0.0
    %124 = vmatpush1.msra.mxu0 0.0
    %125 = vmatprep.subr.mxu0 0.0
    %126 = vmatpush1.msra.mxu0 0.0
    %127 = vmatprep.mubr.f32.mxu0 0.0
    %128 = vmatmul.mubr.f32.gmra.mrb[0].mxu0 %v61
    %v129 = vpop.f32.mrb[0].mxu0
    %v130 = vadd.f32 %v57, %v129
    %v131 = vpop.f32.mrb[0].mxu0
    %132 = vdwg.mxu0
    %v133 = vmax.f32 %v130, 0.0
    %v134 = vld [vmem:[%s3] sm:$0x1]
    %v136 = vlaneseq
    %v137 = vshrl.u32 %v136, 7
    %v138 = vsub.s32 0, %v137
    %v139 = vrot.slane %v134, %v138
    %v141 = vmul.f32 %v133, %v139
    %142 = vadd.xlane.f32.xlu0 %v141
    %v143 = vpop.xlane.xlu0 %142
    %s144 = sld [smem:[#allocation2]]
    %v145 = vstv %s144
    %v146 = vadd.f32 %v143, %v145
    %vm147 = vcmask 7168
    %148 = vst.msk [vmem:[%s5] sm:$0xff] %vm147, %v146
    // Predicated region
    $region30: #{tpu_custom_call.1} parent=1 // pred_check
      _
    $region31: #{tpu_custom_call.1} parent=1 // pred_check_branch
      %150 = sbr.rel (0) target = $region33
    $region32: #{tpu_custom_call.1} parent=1 // pred_region
      _
    $region33: #{tpu_custom_call.1} parent=1 // pred_fallthru
      _
    // Predicated region
    $region34: #{tpu_custom_call.1} parent=1 // pred_check
      _
    $region35: #{tpu_custom_call.1} parent=1 // pred_check_branch
      %152 = sbr.rel (0) target = $region37
    $region36: #{tpu_custom_call.1} parent=1 // pred_region
      _
    $region37: #{tpu_custom_call.1} parent=1 // pred_fallthru
      _
    %153 = vsyncpa [#allocation4], 1
    %154 = vsyncpa [#allocation6], 1

</llo_original>
